<compile_context>
chip_gen: v7x
topology: tpu7x:2x2x1
jax: 0.10.0
libtpu: 0.0.40
codegen_flags: <defaults>
</compile_context>

<pallas_src>
import functools

import jax
import jax.numpy as jnp
from jax.experimental import pallas as pl
from jax.experimental.pallas import tpu as pltpu


def _cdiv(a, b):
    return (a + b - 1) // b


def _round_up(n, m):
    return _cdiv(n, m) * m


def _choose_tb(B, tb_max=2048, min_blocks=4):
    """Pick the batch tile.

    Big enough to amortize the ~0.35us per-grid-step overhead (capped at 2048,
    >=85% of HBM roofline in the measured tile sweep), >= min_blocks grid steps
    when B allows (megacore sharding on v7x + double buffering), a multiple of
    16 (sublane-safe for both f32 input and bf16 output blocks), and with small
    batch-padding waste.
    """
    nb = max(min_blocks, _cdiv(B, tb_max))
    tb = _round_up(_cdiv(B, nb), 16)
    return max(16, min(tb, tb_max))


def mlp_kernel(x_ref, w1_ref, b1_ref, w2_ref, b2_ref, o_ref):
    # x_ref : (TB, K=100)  f32   (unpadded K; Mosaic zero-pads the contraction)
    # w1_ref: (K, HP=128)  f32   b1_ref: (1, HP) f32
    # w2_ref: (HP, OP=128) f32   b2_ref: (1, OP) f32
    # o_ref : (TB, OP)     bf16  (lane-dense writeback, half the f32 bytes)
    h = jnp.dot(x_ref[...], w1_ref[...], preferred_element_type=jnp.float32)
    h = jnp.maximum(h + b1_ref[...], 0.0)          # f32 bias + ReLU on the VPU
    y = jnp.dot(h, w2_ref[...], preferred_element_type=jnp.float32)
    y = jnp.maximum(y + b2_ref[...], 0.0)
    o_ref[...] = y.astype(o_ref.dtype)             # bf16 only at writeback


def prepare_params(w1, b1, w2, b2):
    """One-time lane-padding of the static weights/biases (call once at init).

    Padded weight rows/columns and bias lanes are zero, so the padded output
    lanes are exactly 0 and get sliced off in the wrapper.
    """
    K, H = w1.shape
    O = w2.shape[1]
    HP, OP = _round_up(H, 128), _round_up(O, 128)
    w1p = jnp.zeros((K, HP), jnp.float32).at[:, :H].set(w1.astype(jnp.float32))
    b1p = jnp.zeros((1, HP), jnp.float32).at[:, :H].set(
        b1.reshape(1, H).astype(jnp.float32))
    w2p = jnp.zeros((HP, OP), jnp.float32).at[:H, :O].set(w2.astype(jnp.float32))
    b2p = jnp.zeros((1, OP), jnp.float32).at[:, :O].set(
        b2.reshape(1, O).astype(jnp.float32))
    return w1p, b1p, w2p, b2p


@functools.partial(jax.jit, static_argnames=("n_out", "tb_max"))
def mlp_forward(x, w1p, b1p, w2p, b2p, *, n_out=10, tb_max=2048):
    """x: (B, 100) f32; padded params from prepare_params(). Returns (B, n_out) f32."""
    B, K = x.shape
    HP = w1p.shape[1]
    OP = w2p.shape[1]

    TB = _choose_tb(B, tb_max)
    BP = _round_up(B, TB)
    # Batch-only pad (no dtype cast, no K pad); only runs when B % TB != 0, and
    # TB is chosen so the waste stays small.
    x_in = x if BP == B else jnp.pad(x, ((0, BP - B), (0, 0)))

    out_padded = pl.pallas_call(
        mlp_kernel,
        out_shape=jax.ShapeDtypeStruct((BP, OP), jnp.bfloat16),
        grid=(BP // TB,),
        in_specs=[
            pl.BlockSpec((TB, K), lambda i: (i, 0)),    # x: batch-tiled, unpadded K
            pl.BlockSpec((K, HP), lambda i: (0, 0)),    # w1: VMEM-resident
            pl.BlockSpec((1, HP), lambda i: (0, 0)),    # b1: VMEM-resident
            pl.BlockSpec((HP, OP), lambda i: (0, 0)),   # w2: VMEM-resident
            pl.BlockSpec((1, OP), lambda i: (0, 0)),    # b2: VMEM-resident
        ],
        out_specs=pl.BlockSpec((TB, OP), lambda i: (i, 0)),
        compiler_params=pltpu.CompilerParams(
            dimension_semantics=("parallel",)),  # shards grid steps across v7x's 2 TCs
    )(x_in, w1p, b1p, w2p, b2p)

    # Only the bf16 writeback is quantized; slice off padding and return f32.
    return out_padded[:B, :n_out].astype(jnp.float32)


def init_params(key):
    # Mimic nn.Linear default init: uniform(-1/sqrt(fan_in), 1/sqrt(fan_in)).
    k1, k2, k3, k4 = jax.random.split(key, 4)
    bound1 = 1.0 / jnp.sqrt(100.0)
    bound2 = 1.0 / jnp.sqrt(50.0)
    w1 = jax.random.uniform(k1, (100, 50), jnp.float32, -bound1, bound1)
    b1 = jax.random.uniform(k2, (50,), jnp.float32, -bound1, bound1)
    w2 = jax.random.uniform(k3, (50, 10), jnp.float32, -bound2, bound2)
    b2 = jax.random.uniform(k4, (10,), jnp.float32, -bound2, bound2)
    return w1, b1, w2, b2


def _ref_forward(x, w1, b1, w2, b2):
    hi = jax.lax.Precision.HIGHEST
    h = jnp.maximum(jnp.dot(x, w1, precision=hi) + b1[None, :], 0.0)
    return jnp.maximum(jnp.dot(h, w2, precision=hi) + b2[None, :], 0.0)


if __name__ == "__main__":
    key = jax.random.PRNGKey(0)
    kx, kp = jax.random.split(key)
    w1, b1, w2, b2 = init_params(kp)
    params = prepare_params(w1, b1, w2, b2)   # one-time pad (outside the hot path)

    # Main case: batch a multiple of the tile -> no batch padding, 4 grid steps.
    B = 64
    x = jax.random.normal(kx, (B, 100), jnp.float32)
    out = mlp_forward(x, *params)
    jax.block_until_ready(out)
    assert out.shape == (B, 10)
    ref = _ref_forward(x, w1, b1, w2, b2)
    assert jnp.allclose(out, ref, atol=2e-2, rtol=2e-2), (
        float(jnp.max(jnp.abs(out - ref))))

    # Ragged batch: exercises the (cheap, batch-only) padding path in the wrapper.
    x2 = jax.random.normal(jax.random.PRNGKey(1), (10, 100), jnp.float32)
    out2 = mlp_forward(x2, *params)
    jax.block_until_ready(out2)
    assert out2.shape == (10, 10)
    ref2 = _ref_forward(x2, w1, b1, w2, b2)
    assert jnp.allclose(out2, ref2, atol=2e-2, rtol=2e-2), (
        float(jnp.max(jnp.abs(out2 - ref2))))

    print("KERNEL_OK")
</pallas_src>

<mosaic_0001>
module attributes {stable_mosaic.version = 11 : i64} {
  func.func @mlp_kernel(%arg0: i32, %arg1: memref<16x100xf32, #tpu.memory_space<vmem>>, %arg2: memref<100x128xf32, #tpu.memory_space<vmem>>, %arg3: memref<1x128xf32, #tpu.memory_space<vmem>>, %arg4: memref<128x128xf32, #tpu.memory_space<vmem>>, %arg5: memref<1x128xf32, #tpu.memory_space<vmem>>, %arg6: memref<16x128xbf16, #tpu.memory_space<vmem>>) attributes {dimension_semantics = [#tpu.dimension_semantics<parallel>], iteration_bounds = array<i64: 4>, scalar_prefetch = 0 : i64, scratch_operands = 0 : i64, tpu.core_type = #tpu.core_type<tc>, window_params = [{transform_indices = @transform_0, window_bounds = array<i64: 16, 100>}, {pipeline_mode = #tpu.pipeline_mode<synchronous>, transform_indices = @transform_1, window_bounds = array<i64: 100, 128>}, {pipeline_mode = #tpu.pipeline_mode<synchronous>, transform_indices = @transform_2, window_bounds = array<i64: 1, 128>}, {pipeline_mode = #tpu.pipeline_mode<synchronous>, transform_indices = @transform_3, window_bounds = array<i64: 128, 128>}, {pipeline_mode = #tpu.pipeline_mode<synchronous>, transform_indices = @transform_4, window_bounds = array<i64: 1, 128>}, {transform_indices = @transform_5, window_bounds = array<i64: 16, 128>}]} {
    %c0 = arith.constant 0 : index
    %c0_0 = arith.constant 0 : index
    %0 = vector.load %arg1[%c0, %c0_0] : memref<16x100xf32, #tpu.memory_space<vmem>>, vector<16x100xf32>
    %c0_1 = arith.constant 0 : index
    %c0_2 = arith.constant 0 : index
    %1 = vector.load %arg2[%c0_1, %c0_2] : memref<100x128xf32, #tpu.memory_space<vmem>>, vector<100x128xf32>
    %cst = arith.constant dense<0.000000e+00> : vector<16x128xf32>
    %2 = tpu.matmul %0, %1, %cst {dimension_numbers = #tpu.dot_dimension_numbers<[1], [0], [0], [1], [0, 0, 1, 1], [], []>} : vector<16x100xf32>, vector<100x128xf32>, vector<16x128xf32> -> vector<16x128xf32>
    %c0_3 = arith.constant 0 : index
    %c0_4 = arith.constant 0 : index
    %3 = vector.load %arg3[%c0_3, %c0_4] : memref<1x128xf32, #tpu.memory_space<vmem>>, vector<1x128xf32>
    %4 = vector.broadcast %3 : vector<1x128xf32> to vector<16x128xf32>
    %5 = arith.addf %2, %4 : vector<16x128xf32>
    %cst_5 = arith.constant 0.000000e+00 : f32
    %6 = vector.broadcast %cst_5 : f32 to vector<16x128xf32>
    %7 = arith.maximumf %5, %6 : vector<16x128xf32>
    %c0_6 = arith.constant 0 : index
    %c0_7 = arith.constant 0 : index
    %8 = vector.load %arg4[%c0_6, %c0_7] : memref<128x128xf32, #tpu.memory_space<vmem>>, vector<128x128xf32>
    %cst_8 = arith.constant dense<0.000000e+00> : vector<16x128xf32>
    %9 = tpu.matmul %7, %8, %cst_8 {dimension_numbers = #tpu.dot_dimension_numbers<[1], [0], [0], [1], [0, 0, 1, 1], [], []>} : vector<16x128xf32>, vector<128x128xf32>, vector<16x128xf32> -> vector<16x128xf32>
    %c0_9 = arith.constant 0 : index
    %c0_10 = arith.constant 0 : index
    %10 = vector.load %arg5[%c0_9, %c0_10] : memref<1x128xf32, #tpu.memory_space<vmem>>, vector<1x128xf32>
    %11 = vector.broadcast %10 : vector<1x128xf32> to vector<16x128xf32>
    %12 = arith.addf %9, %11 : vector<16x128xf32>
    %cst_11 = arith.constant 0.000000e+00 : f32
    %13 = vector.broadcast %cst_11 : f32 to vector<16x128xf32>
    %14 = arith.maximumf %12, %13 : vector<16x128xf32>
    %15 = arith.truncf %14 : vector<16x128xf32> to vector<16x128xbf16>
    %c0_12 = arith.constant 0 : index
    %c0_13 = arith.constant 0 : index
    %16 = vector.load %arg6[%c0_12, %c0_13] : memref<16x128xbf16, #tpu.memory_space<vmem>>, vector<16x128xbf16>
    tpu.vector_store %arg6[%c0_12, %c0_13], %15 {strides = array<i32>} : memref<16x128xbf16, #tpu.memory_space<vmem>>, vector<16x128xbf16>,
    return
  }
  func.func @transform_0(%arg0: i32) -> (i32, i32) {
    %c0_i32 = arith.constant 0 : i32
    %c0_i32_0 = arith.constant 0 : i32
    return %arg0, %c0_i32 : i32, i32
  }
  func.func @transform_1(%arg0: i32) -> (i32, i32) {
    %c0_i32 = arith.constant 0 : i32
    %c0_i32_0 = arith.constant 0 : i32
    %c0_i32_1 = arith.constant 0 : i32
    return %c0_i32, %c0_i32_0 : i32, i32
  }
  func.func @transform_2(%arg0: i32) -> (i32, i32) {
    %c0_i32 = arith.constant 0 : i32
    %c0_i32_0 = arith.constant 0 : i32
    %c0_i32_1 = arith.constant 0 : i32
    return %c0_i32, %c0_i32_0 : i32, i32
  }
  func.func @transform_3(%arg0: i32) -> (i32, i32) {
    %c0_i32 = arith.constant 0 : i32
    %c0_i32_0 = arith.constant 0 : i32
    %c0_i32_1 = arith.constant 0 : i32
    return %c0_i32, %c0_i32_0 : i32, i32
  }
  func.func @transform_4(%arg0: i32) -> (i32, i32) {
    %c0_i32 = arith.constant 0 : i32
    %c0_i32_0 = arith.constant 0 : i32
    %c0_i32_1 = arith.constant 0 : i32
    return %c0_i32, %c0_i32_0 : i32, i32
  }
  func.func @transform_5(%arg0: i32) -> (i32, i32) {
    %c0_i32 = arith.constant 0 : i32
    %c0_i32_0 = arith.constant 0 : i32
    return %arg0, %c0_i32 : i32, i32
  }
}

</mosaic_0001>

<llo_original>
// kernel: mlp_forward.1
$region0: #{mlp_forward.1}
  #allocation0 [shape = 'u32[]', space=smem, size = 0x4, offset = 0x4, fixed_abs, tag = 'smem constant byte address 0x4 - core index']
  #allocation1 [shape = 'u32[144,128]{1,0:T(1,128)}', space=vmem, size = 0x12000, scoped, tag = 'internal scratch']
  %s0 = inlined_call_operand.hbm [shape: f32[64,100], index: 0, kind: input, shape index: {}]
  %s1 = inlined_call_operand.hbm [shape: f32[100,128], index: 1, kind: input, shape index: {}]
  %s2 = inlined_call_operand.vmem [shape: f32[1,128], index: 2, kind: input, shape index: {}]
  %s3 = inlined_call_operand.hbm [shape: f32[128,128], index: 3, kind: input, shape index: {}]
  %s4 = inlined_call_operand.vmem [shape: f32[1,128], index: 4, kind: input, shape index: {}]
  %s5 = inlined_call_operand.vmem [shape: bf16[64,128], index: 5, kind: output, shape index: {}]
  %s6 = sld [smem:[#allocation0]]
  $region65: #{mlp_forward.1} parent=0
    _
  %s8 = ssub.s32 1, %s6
  %s9 = scalar_select 0, %s8, %s6
  $region1: #{mlp_forward.1} parent=0
    #allocation2 [shape = 'u8[16384]{0}', space=vmem, size = 0x4000, scoped, tag = 'input window, operand 0']
    #allocation3 [shape = 's32[2]{0}', space=sflag, size = 0x8, scoped, tag = 'scoped memory for mlp_forward.1']
    #allocation4 [shape = 'u8[53248]{0}', space=vmem, size = 0xd000, scoped, tag = 'input window, operand 1, single buffered']
    #allocation5 [shape = 's32[1]{0}', space=sflag, size = 0x4, scoped, tag = 'scoped memory for mlp_forward.1']
    #allocation6 [shape = 'u8[65536]{0}', space=vmem, size = 0x10000, scoped, tag = 'input window, operand 3, single buffered']
    %10 = vsyncpa [#allocation3], 0
    %s11 = scalar_lea.sflag [#allocation3], 1
    %12 = vsyncpa %s11, 0
    %13 = vsyncpa [#allocation5], 0
    loop: start=0, step=1, limit=6
    $region2: #{mlp_forward.1} parent=1 // loop_pre_header
      _
    $region3: #{mlp_forward.1} parent=1 // loop_header
      %s15 = sphi 0, %s19
      %p16 = scmp.ge.s32.totalorder %s15, 6
      %s25 = sphi 0, %s27
      %s28 = sphi 0, %s25
      %s29 = sphi 0, %s28
      %s45 = sphi 0, %s29
      %s49 = sphi 0, %s49
      %s51 = sphi 0, %s49
      %s52 = sphi 0, %s51
      %s66 = sphi 0, %s52
      %s70 = sphi 0, %s70
      %s72 = sphi 0, %s70
      %s73 = sphi 0, %s72
      %s87 = sphi 0, %s73
      %s91 = sphi 0, %s91
      %s93 = sphi 0, %s91
      %s94 = sphi 0, %s93
      %s108 = sphi 0, %s94
      %s112 = sphi 0, %s112
      %s114 = sphi 0, %s112
      %s115 = sphi 0, %s114
      %s129 = sphi 0, %s115
      %s135 = sphi 0, %s137
      %s138 = sphi 0, %s135
      %s139 = sphi 0, %s138
      %s155 = sphi 0, %s139
    $region4: #{mlp_forward.1} parent=1 // loop_header_branch
      %18 = sbr.rel (%p16) target = $region8
    $region5: #{mlp_forward.1} parent=1 // loop_body
      %s20 = ssub.s32 %s15, 1
      %s21 = ssub.s32 %s15, 2
      %s22 = sadd.s32 %s15, 1
      %s23 = ssub.s32 %s15, %s22
      %p24 = scmp.eq.s32.totalorder %s23, 0
      %s26 = sadd.s32 %s25, 1
      %s27 = scalar_select %p24, %s25, %s26
      %p30 = pneg %p24
      %p31 = scmp.eq.s32.totalorder %s15, 3
      %p32 = por %p30, %p31
      %p33 = scmp.ne.s32.totalorder %s25, %s28
      %p34 = scmp.eq.s32.totalorder %s15, 0
      %p35 = por %p33, %p34
      %p36 = scmp.ne.s32.totalorder %s25, %s28
      %p37 = scmp.eq.s32.totalorder %s20, 3
      %p38 = por %p36, %p37
      %p39 = scmp.ne.s32.totalorder %s28, %s29
      %p40 = scmp.eq.s32.totalorder %s20, 0
      %p41 = por %p39, %p40
      %p42 = scmp.ne.s32.totalorder %s28, %s29
      %p43 = scmp.eq.s32.totalorder %s21, 3
      %p44 = por %p42, %p43
      %p46 = scmp.ne.s32.totalorder %s29, %s45
      %p47 = scmp.eq.s32.totalorder %s21, 0
      %p48 = por %p46, %p47
      %s50 = sadd.s32 %s49, 1
      %p53 = scmp.eq.s32.totalorder %s15, 3
      %p54 = scmp.ne.s32.totalorder %s49, %s51
      %p55 = scmp.eq.s32.totalorder %s15, 0
      %p56 = por %p54, %p55
      %p57 = scmp.ne.s32.totalorder %s49, %s51
      %p58 = scmp.eq.s32.totalorder %s20, 3
      %p59 = por %p57, %p58
      %p60 = scmp.ne.s32.totalorder %s51, %s52
      %p61 = scmp.eq.s32.totalorder %s20, 0
      %p62 = por %p60, %p61
      %p63 = scmp.ne.s32.totalorder %s51, %s52
      %p64 = scmp.eq.s32.totalorder %s21, 3
      %p65 = por %p63, %p64
      %p67 = scmp.ne.s32.totalorder %s52, %s66
      %p68 = scmp.eq.s32.totalorder %s21, 0
      %p69 = por %p67, %p68
      %s71 = sadd.s32 %s70, 1
      %p74 = scmp.eq.s32.totalorder %s15, 3
      %p75 = scmp.ne.s32.totalorder %s70, %s72
      %p76 = scmp.eq.s32.totalorder %s15, 0
      %p77 = por %p75, %p76
      %p78 = scmp.ne.s32.totalorder %s70, %s72
      %p79 = scmp.eq.s32.totalorder %s20, 3
      %p80 = por %p78, %p79
      %p81 = scmp.ne.s32.totalorder %s72, %s73
      %p82 = scmp.eq.s32.totalorder %s20, 0
      %p83 = por %p81, %p82
      %p84 = scmp.ne.s32.totalorder %s72, %s73
      %p85 = scmp.eq.s32.totalorder %s21, 3
      %p86 = por %p84, %p85
      %p88 = scmp.ne.s32.totalorder %s73, %s87
      %p89 = scmp.eq.s32.totalorder %s21, 0
      %p90 = por %p88, %p89
      %s92 = sadd.s32 %s91, 1
      %p95 = scmp.eq.s32.totalorder %s15, 3
      %p96 = scmp.ne.s32.totalorder %s91, %s93
      %p97 = scmp.eq.s32.totalorder %s15, 0
      %p98 = por %p96, %p97
      %p99 = scmp.ne.s32.totalorder %s91, %s93
      %p100 = scmp.eq.s32.totalorder %s20, 3
      %p101 = por %p99, %p100
      %p102 = scmp.ne.s32.totalorder %s93, %s94
      %p103 = scmp.eq.s32.totalorder %s20, 0
      %p104 = por %p102, %p103
      %p105 = scmp.ne.s32.totalorder %s93, %s94
      %p106 = scmp.eq.s32.totalorder %s21, 3
      %p107 = por %p105, %p106
      %p109 = scmp.ne.s32.totalorder %s94, %s108
      %p110 = scmp.eq.s32.totalorder %s21, 0
      %p111 = por %p109, %p110
      %s113 = sadd.s32 %s112, 1
      %p116 = scmp.eq.s32.totalorder %s15, 3
      %p117 = scmp.ne.s32.totalorder %s112, %s114
      %p118 = scmp.eq.s32.totalorder %s15, 0
      %p119 = por %p117, %p118
      %p120 = scmp.ne.s32.totalorder %s112, %s114
      %p121 = scmp.eq.s32.totalorder %s20, 3
      %p122 = por %p120, %p121
      %p123 = scmp.ne.s32.totalorder %s114, %s115
      %p124 = scmp.eq.s32.totalorder %s20, 0
      %p125 = por %p123, %p124
      %p126 = scmp.ne.s32.totalorder %s114, %s115
      %p127 = scmp.eq.s32.totalorder %s21, 3
      %p128 = por %p126, %p127
      %p130 = scmp.ne.s32.totalorder %s115, %s129
      %p131 = scmp.eq.s32.totalorder %s21, 0
      %p132 = por %p130, %p131
      %s133 = ssub.s32 %s15, %s22
      %p134 = scmp.eq.s32.totalorder %s133, 0
      %s136 = sadd.s32 %s135, 1
      %s137 = scalar_select %p134, %s135, %s136
      %p140 = pneg %p134
      %p141 = scmp.eq.s32.totalorder %s15, 3
      %p142 = por %p140, %p141
      %p143 = scmp.ne.s32.totalorder %s135, %s138
      %p144 = scmp.eq.s32.totalorder %s15, 0
      %p145 = por %p143, %p144
      %p146 = scmp.ne.s32.totalorder %s135, %s138
      %p147 = scmp.eq.s32.totalorder %s20, 3
      %p148 = por %p146, %p147
      %p149 = scmp.ne.s32.totalorder %s138, %s139
      %p150 = scmp.eq.s32.totalorder %s20, 0
      %p151 = por %p149, %p150
      %p152 = scmp.ne.s32.totalorder %s138, %s139
      %p153 = scmp.eq.s32.totalorder %s21, 3
      %p154 = por %p152, %p153
      %p156 = scmp.ne.s32.totalorder %s139, %s155
      %p157 = scmp.eq.s32.totalorder %s21, 0
      %p158 = por %p156, %p157
      %p159 = scmp.le.s32.totalorder 1, %s15
      %p160 = scmp.lt.s32.totalorder %s15, 5
      %p161 = pnand %p159, %p160
      %p162 = pneg %p161
      // Predicated region
      $region9: #{mlp_forward.1} parent=5 // pred_check
        _
      $region10: #{mlp_forward.1} parent=5 // pred_check_branch
        %164 = sbr.rel (%p161) target = $region12
      $region11: #{mlp_forward.1} parent=5 // pred_region
        %s165 = ssub.s32 %s15, 1
        // Predicated region
        $region13: #{mlp_forward.1} parent=11 // pred_check
          %p166 = pneg %p62
        $region14: #{mlp_forward.1} parent=11 // pred_check_branch
          %168 = sbr.rel (%p166) target = $region16
        $region15: #{mlp_forward.1} parent=11 // pred_region
          %s170 = ssub.s32 1664, 1664
          %171 = vsyncadd [#allocation5], %s170
          %s172 = sshll.u32 [#allocation4], 4
          %s173 = int_to_ptr.vmem [resolvable:$true] %s172
          %178 = dma.hbm_to_vmem [thread:$0]  %s1, 1664, %s173, [#allocation5], 128, 128, 8
        $region16: #{mlp_forward.1} parent=11 // pred_fallthru
          _
        // Predicated region
        $region17: #{mlp_forward.1} parent=11 // pred_check
          %p179 = pneg %p83
        $region18: #{mlp_forward.1} parent=11 // pred_check_branch
          %181 = sbr.rel (%p179) target = $region20
        $region19: #{mlp_forward.1} parent=11 // pred_region
          _
        $region20: #{mlp_forward.1} parent=11 // pred_fallthru
          _
        // Predicated region
        $region21: #{mlp_forward.1} parent=11 // pred_check
          %p182 = pneg %p104
        $region22: #{mlp_forward.1} parent=11 // pred_check_branch
          %184 = sbr.rel (%p182) target = $region24
        $region23: #{mlp_forward.1} parent=11 // pred_region
          %s186 = ssub.s32 2048, 2048
          %187 = vsyncadd [#allocation5], %s186
          %s188 = sshll.u32 [#allocation6], 4
          %s189 = int_to_ptr.vmem [resolvable:$true] %s188
          %194 = dma.hbm_to_vmem [thread:$0]  %s3, 2048, %s189, [#allocation5], 128, 128, 8
        $region24: #{mlp_forward.1} parent=11 // pred_fallthru
          _
        // Predicated region
        $region25: #{mlp_forward.1} parent=11 // pred_check
          %p195 = pneg %p125
        $region26: #{mlp_forward.1} parent=11 // pred_check_branch
          %197 = sbr.rel (%p195) target = $region28
        $region27: #{mlp_forward.1} parent=11 // pred_region
          _
        $region28: #{mlp_forward.1} parent=11 // pred_fallthru
          _
      $region12: #{mlp_forward.1} parent=5 // pred_fallthru
        _
      %p198 = scmp.lt.s32.totalorder %s15, 4
      // Predicated region
      $region29: #{mlp_forward.1} parent=5 // pred_check
        %p199 = pneg %p198
      $region30: #{mlp_forward.1} parent=5 // pred_check_branch
        %201 = sbr.rel (%p199) target = $region32
      $region31: #{mlp_forward.1} parent=5 // pred_region
        // Predicated region
        $region33: #{mlp_forward.1} parent=31 // pred_check
          %p202 = pneg %p35
        $region34: #{mlp_forward.1} parent=31 // pred_check_branch
          %204 = sbr.rel (%p202) target = $region36
        $region35: #{mlp_forward.1} parent=31 // pred_region
          %s205 = sand.u32 %s25, 1
          %s206 = scalar_lea.sflag [#allocation3], %s205
          %s207 = sand.u32 %s25, 1
          %s208 = smul.addr %s207, 16
          %s209 = scalar_lea.vmem [#allocation2], %s208
          %s210 = smul.u32 2, %s15
          %s212 = ssub.s32 256, 256
          %213 = vsyncadd %s206, %s212
          %s214 = smul.addr %s210, 128
          %s215 = scalar_lea.hbm %s0, %s214
          %s216 = sshll.u32 %s209, 4
          %s217 = int_to_ptr.vmem [resolvable:$true] %s216
          %222 = dma.hbm_to_vmem [thread:$0]  %s215, 256, %s217, %s206, 128, 128, 8
        $region36: #{mlp_forward.1} parent=31 // pred_fallthru
          _
      $region32: #{mlp_forward.1} parent=5 // pred_fallthru
        _
      %p223 = scmp.le.s32.totalorder 1, %s15
      %p224 = scmp.lt.s32.totalorder %s15, 5
      %p225 = pnand %p223, %p224
      %p226 = pneg %p225
      // Predicated region
      $region37: #{mlp_forward.1} parent=5 // pred_check
        _
      $region38: #{mlp_forward.1} parent=5 // pred_check_branch
        %228 = sbr.rel (%p225) target = $region40
      $region39: #{mlp_forward.1} parent=5 // pred_region
        %s229 = ssub.s32 %s15, 1
        %s230 = sand.u32 %s28, 1
        %s231 = scalar_lea.sflag [#allocation3], %s230
        %s232 = sand.u32 %s28, 1
        %s233 = smul.addr %s232, 16
        %s234 = scalar_lea.vmem [#allocation2], %s233
        // Predicated region
        $region41: #{mlp_forward.1} parent=39 // pred_check
          %p235 = pneg %p41
        $region42: #{mlp_forward.1} parent=39 // pred_check_branch
          %237 = sbr.rel (%p235) target = $region44
        $region43: #{mlp_forward.1} parent=39 // pred_region
          %238 = dma.done %s231, 256
        $region44: #{mlp_forward.1} parent=39 // pred_fallthru
          _
        // Predicated region
        $region45: #{mlp_forward.1} parent=39 // pred_check
          %p239 = pneg %p62
        $region46: #{mlp_forward.1} parent=39 // pred_check_branch
          %241 = sbr.rel (%p239) target = $region48
        $region47: #{mlp_forward.1} parent=39 // pred_region
          %242 = dma.done [#allocation5], 1664
        $region48: #{mlp_forward.1} parent=39 // pred_fallthru
          _
        // Predicated region
        $region49: #{mlp_forward.1} parent=39 // pred_check
          %p243 = pneg %p104
        $region50: #{mlp_forward.1} parent=39 // pred_check_branch
          %245 = sbr.rel (%p243) target = $region52
        $region51: #{mlp_forward.1} parent=39 // pred_region
          %246 = dma.done [#allocation5], 2048
        $region52: #{mlp_forward.1} parent=39 // pred_fallthru
          _
        %s247 = sand.u32 %s28, 1
        %s248 = scalar_lea.sflag [#allocation3], %s247
        %s249 = sand.u32 %s28, 1
        %s250 = smul.addr %s249, 16
        %s251 = scalar_lea.vmem [#allocation2], %s250
        %p252 = pneg %p41
        %p253 = pneg %p38
        %p254 = pneg %p62
        %p255 = pneg %p59
        %p256 = pneg %p83
        %p257 = pneg %p80
        %p258 = pneg %p104
        %p259 = pneg %p101
        %p260 = pneg %p125
        %p261 = pneg %p122
        %p262 = pneg %p151
        %p263 = pneg %p148
        %s264 = smul.u32 2, %s20
        %p265 = scmp.lt.s32.totalorder %s264, 7
        %s266 = scalar_select %p265, %s264, 7
        %s267 = smul.addr %s266, 4
        %s268 = scalar_lea.vmem %s5, %s267
        %s269 = smul.u32 2, %s20
        %s270 = smul.u32 2, %s20
        %p271 = scmp.lt.s32.totalorder %s270, 7
        %s272 = scalar_select %p271, %s270, 7
        %s273 = smul.addr %s272, 4
        %s274 = scalar_lea.vmem %s5, %s273
        %s275 = smul.u32 2, %s20
        %v276 = vld [vmem:[%s234] sm:$0xff]
        %v277 = vld [vmem:[%s234 + $0x8] sm:$0xff]
        %v278 = vld [vmem:[#allocation4] sm:$0xff]
        %v279 = vld [vmem:[#allocation4 + $0x8] sm:$0xff]
        %v280 = vld [vmem:[#allocation4 + $0x10] sm:$0xff]
        %v281 = vld [vmem:[#allocation4 + $0x18] sm:$0xff]
        %v282 = vld [vmem:[#allocation4 + $0x20] sm:$0xff]
        %v283 = vld [vmem:[#allocation4 + $0x28] sm:$0xff]
        %v284 = vld [vmem:[#allocation4 + $0x30] sm:$0xff]
        %v285 = vld [vmem:[#allocation4 + $0x38] sm:$0xff]
        %v286 = vld [vmem:[#allocation4 + $0x40] sm:$0xff]
        %v287 = vld [vmem:[#allocation4 + $0x48] sm:$0xff]
        %v288 = vld [vmem:[#allocation4 + $0x50] sm:$0xff]
        %v289 = vld [vmem:[#allocation4 + $0x58] sm:$0xff]
        %v290 = vld [vmem:[#allocation4 + $0x60] sm:$0xf]
        %v291 = vld [vmem:[%s2] sm:$0x1]
        %v293 = vlaneseq
        %v294 = vshrl.u32 %v293, 7
        %v295 = vsub.s32 0, %v294
        %v296 = vrot.slane %v291, %v295
        %vm298 = vcmask 818176
        %v300 = vsel %vm298, %v276, 0
        %v303 = vsel %vm298, %v277, 0
        %vm305 = vcmask 1043456
        %v307 = vsel %vm305, %v290, 0
        %309 = vmatprep.subr.mxu0 0.0
        %310 = vmatpush1.msra.mxu0 %v278
        %311 = vmatprep.subr.mxu0 0.0
        %312 = vmatpush1.msra.mxu0 %v279
        %313 = vmatprep.subr.mxu0 0.0
        %314 = vmatpush1.msra.mxu0 %v280
        %315 = vmatprep.subr.mxu0 0.0
        %316 = vmatpush1.msra.mxu0 %v281
        %317 = vmatprep.subr.mxu0 0.0
        %318 = vmatpush1.msra.mxu0 %v282
        %319 = vmatprep.subr.mxu0 0.0
        %320 = vmatpush1.msra.mxu0 %v283
        %321 = vmatprep.subr.mxu0 0.0
        %322 = vmatpush1.msra.mxu0 %v284
        %323 = vmatprep.subr.mxu0 0.0
        %324 = vmatpush1.msra.mxu0 %v285
        %325 = vmatprep.subr.mxu0 0.0
        %326 = vmatpush1.msra.mxu0 %v286
        %327 = vmatprep.subr.mxu0 0.0
        %328 = vmatpush1.msra.mxu0 %v287
        %329 = vmatprep.subr.mxu0 0.0
        %330 = vmatpush1.msra.mxu0 %v288
        %331 = vmatprep.subr.mxu0 0.0
        %332 = vmatpush1.msra.mxu0 %v289
        %333 = vmatprep.subr.mxu0 0.0
        %334 = vmatpush1.msra.mxu0 %v307
        %335 = vmatprep.subr.mxu0 0.0
        %336 = vmatpush1.msra.mxu0 0.0
        %337 = vmatprep.subr.mxu0 0.0
        %338 = vmatpush1.msra.mxu0 0.0
        %339 = vmatprep.subr.mxu0 0.0
        %340 = vmatpush1.msra.mxu0 0.0
        %341 = vmatprep.subr.mxu0 0.0
        %342 = vmatpush1.msra.mxu0 0.0
        %343 = vmatprep.subr.mxu0 0.0
        %344 = vmatpush1.msra.mxu0 0.0
        %345 = vmatprep.subr.mxu0 0.0
        %346 = vmatpush1.msra.mxu0 0.0
        %347 = vmatprep.subr.mxu0 0.0
        %348 = vmatpush1.msra.mxu0 0.0
        %349 = vmatprep.subr.mxu0 0.0
        %350 = vmatpush1.msra.mxu0 0.0
        %351 = vmatprep.subr.mxu0 0.0
        %352 = vmatpush1.msra.mxu0 0.0
        %353 = vmatprep.subr.mxu0 0.0
        %354 = vmatpush1.msra.mxu0 0.0
        %355 = vmatprep.subr.mxu0 0.0
        %356 = vmatpush1.msra.mxu0 0.0
        %357 = vmatprep.subr.mxu0 0.0
        %358 = vmatpush1.msra.mxu0 0.0
        %359 = vmatprep.subr.mxu0 0.0
        %360 = vmatpush1.msra.mxu0 0.0
        %361 = vmatprep.subr.mxu0 0.0
        %362 = vmatpush1.msra.mxu0 0.0
        %363 = vmatprep.subr.mxu0 0.0
        %364 = vmatpush1.msra.mxu0 0.0
        %365 = vmatprep.subr.mxu0 0.0
        %366 = vmatpush1.msra.mxu0 0.0
        %367 = vmatprep.subr.mxu0 0.0
        %368 = vmatpush1.msra.mxu0 0.0
        %369 = vmatprep.subr.mxu0 0.0
        %370 = vmatpush1.msra.mxu0 0.0
        %371 = vmatprep.subr.mxu0 0.0
        %372 = vmatpush1.msra.mxu0 0.0
        %373 = vmatprep.mubr.f32.mxu0 0.0
        %374 = vmatmul.mubr.f32.gmra.mrb[0].mxu0 %v300
        %v375 = vpop.f32.mrb[0].mxu0
        %v376 = vadd.f32 %v296, %v375
        %v377 = vpop.f32.mrb[0].mxu0
        %378 = vmatprep.mubr.f32.mxu0 0.0
        %379 = vmatmul.mubr.f32.gmra.mrb[0].mxu0 %v303
        %v380 = vpop.f32.mrb[0].mxu0
        %v381 = vadd.f32 %v296, %v380
        %v382 = vpop.f32.mrb[0].mxu0
        %383 = vdwg.mxu0
        %v384 = vmax.f32 %v376, 0.0
        %v385 = vmax.f32 %v381, 0.0
        %v386 = vld [vmem:[#allocation6] sm:$0xff]
        %v387 = vld [vmem:[#allocation6 + $0x8] sm:$0xff]
        %v388 = vld [vmem:[#allocation6 + $0x10] sm:$0xff]
        %v389 = vld [vmem:[#allocation6 + $0x18] sm:$0xff]
        %v390 = vld [vmem:[#allocation6 + $0x20] sm:$0xff]
        %v391 = vld [vmem:[#allocation6 + $0x28] sm:$0xff]
        %v392 = vld [vmem:[#allocation6 + $0x30] sm:$0xff]
        %v393 = vld [vmem:[#allocation6 + $0x38] sm:$0xff]
        %v394 = vld [vmem:[#allocation6 + $0x40] sm:$0xff]
        %v395 = vld [vmem:[#allocation6 + $0x48] sm:$0xff]
        %v396 = vld [vmem:[#allocation6 + $0x50] sm:$0xff]
        %v397 = vld [vmem:[#allocation6 + $0x58] sm:$0xff]
        %v398 = vld [vmem:[#allocation6 + $0x60] sm:$0xff]
        %v399 = vld [vmem:[#allocation6 + $0x68] sm:$0xff]
        %v400 = vld [vmem:[#allocation6 + $0x70] sm:$0xff]
        %v401 = vld [vmem:[#allocation6 + $0x78] sm:$0xff]
        %v402 = vld [vmem:[%s4] sm:$0x1]
        %v404 = vlaneseq
        %v405 = vshrl.u32 %v404, 7
        %v406 = vsub.s32 0, %v405
        %v407 = vrot.slane %v402, %v406
        %409 = vmatprep.subr.mxu0 0.0
        %410 = vmatpush1.msra.mxu0 %v386
        %411 = vmatprep.subr.mxu0 0.0
        %412 = vmatpush1.msra.mxu0 %v387
        %413 = vmatprep.subr.mxu0 0.0
        %414 = vmatpush1.msra.mxu0 %v388
        %415 = vmatprep.subr.mxu0 0.0
        %416 = vmatpush1.msra.mxu0 %v389
        %417 = vmatprep.subr.mxu0 0.0
        %418 = vmatpush1.msra.mxu0 %v390
        %419 = vmatprep.subr.mxu0 0.0
        %420 = vmatpush1.msra.mxu0 %v391
        %421 = vmatprep.subr.mxu0 0.0
        %422 = vmatpush1.msra.mxu0 %v392
        %423 = vmatprep.subr.mxu0 0.0
        %424 = vmatpush1.msra.mxu0 %v393
        %425 = vmatprep.subr.mxu0 0.0
        %426 = vmatpush1.msra.mxu0 %v394
        %427 = vmatprep.subr.mxu0 0.0
        %428 = vmatpush1.msra.mxu0 %v395
        %429 = vmatprep.subr.mxu0 0.0
        %430 = vmatpush1.msra.mxu0 %v396
        %431 = vmatprep.subr.mxu0 0.0
        %432 = vmatpush1.msra.mxu0 %v397
        %433 = vmatprep.subr.mxu0 0.0
        %434 = vmatpush1.msra.mxu0 %v398
        %435 = vmatprep.subr.mxu0 0.0
        %436 = vmatpush1.msra.mxu0 %v399
        %437 = vmatprep.subr.mxu0 0.0
        %438 = vmatpush1.msra.mxu0 %v400
        %439 = vmatprep.subr.mxu0 0.0
        %440 = vmatpush1.msra.mxu0 %v401
        %441 = vmatprep.subr.mxu0 0.0
        %442 = vmatpush1.msra.mxu0 0.0
        %443 = vmatprep.subr.mxu0 0.0
        %444 = vmatpush1.msra.mxu0 0.0
        %445 = vmatprep.subr.mxu0 0.0
        %446 = vmatpush1.msra.mxu0 0.0
        %447 = vmatprep.subr.mxu0 0.0
        %448 = vmatpush1.msra.mxu0 0.0
        %449 = vmatprep.subr.mxu0 0.0
        %450 = vmatpush1.msra.mxu0 0.0
        %451 = vmatprep.subr.mxu0 0.0
        %452 = vmatpush1.msra.mxu0 0.0
        %453 = vmatprep.subr.mxu0 0.0
        %454 = vmatpush1.msra.mxu0 0.0
        %455 = vmatprep.subr.mxu0 0.0
        %456 = vmatpush1.msra.mxu0 0.0
        %457 = vmatprep.subr.mxu0 0.0
        %458 = vmatpush1.msra.mxu0 0.0
        %459 = vmatprep.subr.mxu0 0.0
        %460 = vmatpush1.msra.mxu0 0.0
        %461 = vmatprep.subr.mxu0 0.0
        %462 = vmatpush1.msra.mxu0 0.0
        %463 = vmatprep.subr.mxu0 0.0
        %464 = vmatpush1.msra.mxu0 0.0
        %465 = vmatprep.subr.mxu0 0.0
        %466 = vmatpush1.msra.mxu0 0.0
        %467 = vmatprep.subr.mxu0 0.0
        %468 = vmatpush1.msra.mxu0 0.0
        %469 = vmatprep.subr.mxu0 0.0
        %470 = vmatpush1.msra.mxu0 0.0
        %471 = vmatprep.subr.mxu0 0.0
        %472 = vmatpush1.msra.mxu0 0.0
        %473 = vmatprep.mubr.f32.mxu0 0.0
        %474 = vmatmul.mubr.f32.gmra.mrb[0].mxu0 %v384
        %v475 = vpop.f32.mrb[0].mxu0
        %v476 = vadd.f32 %v407, %v475
        %v477 = vpop.f32.mrb[0].mxu0
        %478 = vmatprep.mubr.f32.mxu0 0.0
        %479 = vmatmul.mubr.f32.gmra.mrb[0].mxu0 %v385
        %v480 = vpop.f32.mrb[0].mxu0
        %v481 = vadd.f32 %v407, %v480
        %v482 = vpop.f32.mrb[0].mxu0
        %483 = vdwg.mxu0
        %v484 = vmax.f32 %v476, 0.0
        %v485 = vmax.f32 %v481, 0.0
        %v486 = vpack.c.bf16 %v485, %v484
        %v488 = vunpack.c.l.b16 %v486
        %v489 = vunpack.c.h.b16 %v486
        %v490 = vpack.c.b16 %v488, %v488
        %v491 = vpack.c.b16 %v489, %v489
        %494 = vst [vmem:[%s274] sm:$0xf] %v490
        %495 = vst [vmem:[%s274 + $0x4] sm:$0xf] %v491
        %s496 = smul.u32 2, %s20
        %p497 = scmp.lt.s32.totalorder %s496, 7
        %s498 = scalar_select %p497, %s496, 7
        %s499 = smul.addr %s498, 4
        %s500 = scalar_lea.vmem %s5, %s499
        // Predicated region
        $region53: #{mlp_forward.1} parent=39 // pred_check
          %p501 = pneg %p148
        $region54: #{mlp_forward.1} parent=39 // pred_check_branch
          %503 = sbr.rel (%p501) target = $region56
        $region55: #{mlp_forward.1} parent=39 // pred_region
          %s504 = smul.u32 2, %s20
        $region56: #{mlp_forward.1} parent=39 // pred_fallthru
          _
      $region40: #{mlp_forward.1} parent=5 // pred_fallthru
        _
      %p505 = scmp.le.s32.totalorder 2, %s15
      // Predicated region
      $region57: #{mlp_forward.1} parent=5 // pred_check
        %p506 = pneg %p505
      $region58: #{mlp_forward.1} parent=5 // pred_check_branch
        %508 = sbr.rel (%p506) target = $region60
      $region59: #{mlp_forward.1} parent=5 // pred_region
        %s509 = ssub.s32 %s15, 2
        // Predicated region
        $region61: #{mlp_forward.1} parent=59 // pred_check
          %p510 = pneg %p154
        $region62: #{mlp_forward.1} parent=59 // pred_check_branch
          %512 = sbr.rel (%p510) target = $region64
        $region63: #{mlp_forward.1} parent=59 // pred_region
          %s513 = smul.u32 2, %s21
          %p514 = scmp.lt.s32.totalorder %s513, 7
          %s515 = scalar_select %p514, %s513, 7
          %s516 = smul.addr %s515, 4
          %s517 = scalar_lea.vmem %s5, %s516
        $region64: #{mlp_forward.1} parent=59 // pred_fallthru
          _
      $region60: #{mlp_forward.1} parent=5 // pred_fallthru
        _
    $region6: #{mlp_forward.1} parent=1 // loop_footer
      %s19 = sadd.s32 1, %s15
    $region7: #{mlp_forward.1} parent=1 // loop_footer_branch
      %14 = sbr.rel target = $region3
    $region8: #{mlp_forward.1} parent=1 // loop_exit
      _
    %518 = vsyncpa [#allocation3], 1
    %s519 = scalar_lea.sflag [#allocation3], 1
    %520 = vsyncpa %s519, 1
    %521 = vsyncpa [#allocation5], 1

</llo_original>
